<compile_context>
chip_gen: v5e
topology: v5e:2x2
jax: 0.10.0
libtpu: 0.0.40
codegen_flags: <defaults>
</compile_context>

<pallas_src>
import math

import jax
import jax.numpy as jnp
from jax.experimental import pallas as pl
from jax.experimental.pallas import tpu as pltpu

_GROUP = 9                    # one trailing (3, 3) block = 9 flat elements
_LANE_W = _GROUP * 128        # 1152: multiple of 9 (groups never straddle a
                              # row) and of 128 (dense, unmasked vreg lanes)


def _linear_add_relu_kernel(coef_ref, x_ref, o_ref):
    # coef_ref: (6, 1152) VMEM, periodic per-lane coefficients:
    #   rows 0..4 -> coefficient on tap x[p+s] for s = -2, -1, 0, +1, +2
    #   row  5    -> bias[j] + other[r, j]   (j = p % 3, r = (p % 9) // 3)
    # x_ref / o_ref: (tile_rows, 1152) blocks of the flat contiguous tensor.
    x = x_ref[...]

    # Hoisted coefficient reads (once per block); broadcast over sublanes.
    c_m2 = coef_ref[0:1, :]
    c_m1 = coef_ref[1:2, :]
    c_0 = coef_ref[2:3, :]
    c_p1 = coef_ref[3:4, :]
    c_p2 = coef_ref[4:5, :]
    off = coef_ref[5:6, :]

    # np.roll semantics: roll(x, t)[p] == x[p - t].  Row-edge wraparound only
    # ever lands on lanes whose coefficient is zero (groups are 3-aligned and
    # each 1152-lane row holds an integer number of groups).
    x_m2 = pltpu.roll(x, shift=2, axis=1)              # x[p - 2]
    x_m1 = pltpu.roll(x, shift=1, axis=1)              # x[p - 1]
    x_p1 = pltpu.roll(x, shift=_LANE_W - 1, axis=1)    # x[p + 1]
    x_p2 = pltpu.roll(x, shift=_LANE_W - 2, axis=1)    # x[p + 2]

    y = (x_m2 * c_m2 + x_m1 * c_m1 + x * c_0
         + x_p1 * c_p1 + x_p2 * c_p2 + off)
    o_ref[...] = jnp.maximum(y, 0.0)


def _build_coef(weight, bias, other):
    """(6, 1152) per-lane coefficient table for the 5-tap group convolution."""
    w = weight.astype(jnp.float32)    # W[j, k]   (Linear: out_j = sum_k x_k W[j,k])
    b = bias.astype(jnp.float32)      # bias[j]
    o = other.astype(jnp.float32)     # other[r, j]

    p = jnp.arange(_LANE_W)
    j = p % 3
    r = (p % _GROUP) // 3

    rows = []
    for s in (-2, -1, 0, 1, 2):       # tap x[p + s] feeds output j with k = j + s
        k = j + s
        ok = (k >= 0) & (k <= 2)
        rows.append(jnp.where(ok, w[j, jnp.clip(k, 0, 2)], 0.0))
    rows.append(b[j] + o[r, j])       # bias + other, folded
    return jnp.stack(rows, axis=0)    # (6, 1152) f32


def model_forward(x, weight, bias, other, *, tile_rows_max=256):
    """relu(x @ weight.T + bias + other) for x with trailing dims (3, 3)."""
    assert x.shape[-2:] == (3, 3)
    orig_shape = x.shape
    n_elems = math.prod(orig_shape)

    x_flat = x.reshape(-1).astype(jnp.float32)        # free: contiguous view

    pad = (-n_elems) % _LANE_W
    if pad:
        # TODO(synk): batches not a multiple of 128 fall back to one padded
        # copy (and an output slice); aligned batches are copy-free.
        x_flat = jnp.pad(x_flat, (0, pad))
    rows = (n_elems + pad) // _LANE_W
    x2 = x_flat.reshape(rows, _LANE_W)                # free: contiguous view

    # Tile selection: big blocks (~1.1 MiB max), sublane dim a multiple of 8
    # (or the full dim), and >= 2 grid steps when possible (v7x megacore).
    if rows <= 16:
        tile_rows = rows
    else:
        target = min(tile_rows_max, pl.cdiv(rows, 2))
        tile_rows = max(8, (target // 8) * 8)

    coef = _build_coef(weight, bias, other)

    out2 = pl.pallas_call(
        _linear_add_relu_kernel,
        out_shape=jax.ShapeDtypeStruct((rows, _LANE_W), jnp.float32),
        grid=(pl.cdiv(rows, tile_rows),),
        in_specs=[
            pl.BlockSpec((6, _LANE_W), lambda i: (0, 0)),          # resident coef
            pl.BlockSpec((tile_rows, _LANE_W), lambda i: (i, 0)),  # x slab block
        ],
        out_specs=pl.BlockSpec((tile_rows, _LANE_W), lambda i: (i, 0)),
        compiler_params=pltpu.CompilerParams(
            dimension_semantics=("parallel",),
        ),
    )(coef, x2)

    out_flat = out2.reshape(-1)
    if pad:
        out_flat = out_flat[:n_elems]
    return out_flat.reshape(orig_shape)


def _reference(x, weight, bias, other):
    y = jnp.einsum("...rk,jk->...rj", x, weight) + bias
    return jnp.maximum(y + other, 0.0)


if __name__ == "__main__":
    key = jax.random.PRNGKey(0)
    k_x, k_w, k_b, k_o = jax.random.split(key, 4)

    bound = 1.0 / math.sqrt(3.0)
    weight = jax.random.uniform(k_w, (3, 3), jnp.float32, -bound, bound)
    bias = jax.random.uniform(k_b, (3,), jnp.float32, -bound, bound)
    other = jax.random.normal(k_o, (3, 3), dtype=jnp.float32)

    fwd = jax.jit(model_forward)

    # Main path: N = 1024 batch rows -> (8, 1152) slab, single dense block.
    x = jax.random.normal(k_x, (2, 512, 3, 3), dtype=jnp.float32)
    out = fwd(x, weight, bias, other)
    jax.block_until_ready(out)
    assert out.shape == x.shape
    assert jnp.allclose(out, _reference(x, weight, bias, other),
                        atol=1e-5, rtol=1e-5)

    # Multi-block path with a masked ragged last block: rows=20 -> grid=(3,).
    x_big = jax.random.normal(k_x, (2, 1280, 3, 3), dtype=jnp.float32)
    out_big = fwd(x_big, weight, bias, other)
    jax.block_until_ready(out_big)
    assert jnp.allclose(out_big, _reference(x_big, weight, bias, other),
                        atol=1e-5, rtol=1e-5)

    # Tiny, non-128-aligned batch (exercises the padded fallback path).
    x_small = jax.random.normal(k_x, (2, 16, 3, 3), dtype=jnp.float32)
    out_small = fwd(x_small, weight, bias, other)
    jax.block_until_ready(out_small)
    assert jnp.allclose(out_small, _reference(x_small, weight, bias, other),
                        atol=1e-5, rtol=1e-5)

    print("KERNEL_OK")
</pallas_src>

<mosaic_0001>
module attributes {stable_mosaic.version = 11 : i64} {
  func.func @_linear_add_relu_kernel(%arg0: i32, %arg1: memref<6x1152xf32, #tpu.memory_space<vmem>>, %arg2: memref<8x1152xf32, #tpu.memory_space<vmem>>, %arg3: memref<8x1152xf32, #tpu.memory_space<vmem>>) attributes {dimension_semantics = [#tpu.dimension_semantics<parallel>], iteration_bounds = array<i64: 1>, scalar_prefetch = 0 : i64, scratch_operands = 0 : i64, tpu.core_type = #tpu.core_type<tc>, window_params = [{pipeline_mode = #tpu.pipeline_mode<synchronous>, transform_indices = @transform_0, window_bounds = array<i64: 6, 1152>}, {transform_indices = @transform_1, window_bounds = array<i64: 8, 1152>}, {transform_indices = @transform_2, window_bounds = array<i64: 8, 1152>}]} {
    %c0 = arith.constant 0 : index
    %c0_0 = arith.constant 0 : index
    %0 = vector.load %arg2[%c0, %c0_0] : memref<8x1152xf32, #tpu.memory_space<vmem>>, vector<8x1152xf32>
    %c0_1 = arith.constant 0 : index
    %c0_2 = arith.constant 0 : index
    %1 = vector.load %arg1[%c0_1, %c0_2] : memref<6x1152xf32, #tpu.memory_space<vmem>>, vector<1x1152xf32>
    %c1 = arith.constant 1 : index
    %c0_3 = arith.constant 0 : index
    %2 = vector.load %arg1[%c1, %c0_3] : memref<6x1152xf32, #tpu.memory_space<vmem>>, vector<1x1152xf32>
    %c2 = arith.constant 2 : index
    %c0_4 = arith.constant 0 : index
    %3 = vector.load %arg1[%c2, %c0_4] : memref<6x1152xf32, #tpu.memory_space<vmem>>, vector<1x1152xf32>
    %c3 = arith.constant 3 : index
    %c0_5 = arith.constant 0 : index
    %4 = vector.load %arg1[%c3, %c0_5] : memref<6x1152xf32, #tpu.memory_space<vmem>>, vector<1x1152xf32>
    %c4 = arith.constant 4 : index
    %c0_6 = arith.constant 0 : index
    %5 = vector.load %arg1[%c4, %c0_6] : memref<6x1152xf32, #tpu.memory_space<vmem>>, vector<1x1152xf32>
    %c5 = arith.constant 5 : index
    %c0_7 = arith.constant 0 : index
    %6 = vector.load %arg1[%c5, %c0_7] : memref<6x1152xf32, #tpu.memory_space<vmem>>, vector<1x1152xf32>
    %c2_i32 = arith.constant 2 : i32
    %7 = tpu.dynamic_rotate %0 by %c2_i32 dim 1 : vector<8x1152xf32>, i32 -> vector<8x1152xf32>
    %c1_i32 = arith.constant 1 : i32
    %8 = tpu.dynamic_rotate %0 by %c1_i32 dim 1 : vector<8x1152xf32>, i32 -> vector<8x1152xf32>
    %c1151_i32 = arith.constant 1151 : i32
    %9 = tpu.dynamic_rotate %0 by %c1151_i32 dim 1 : vector<8x1152xf32>, i32 -> vector<8x1152xf32>
    %c1150_i32 = arith.constant 1150 : i32
    %10 = tpu.dynamic_rotate %0 by %c1150_i32 dim 1 : vector<8x1152xf32>, i32 -> vector<8x1152xf32>
    %11 = vector.broadcast %1 : vector<1x1152xf32> to vector<8x1152xf32>
    %12 = arith.mulf %7, %11 : vector<8x1152xf32>
    %13 = vector.broadcast %2 : vector<1x1152xf32> to vector<8x1152xf32>
    %14 = arith.mulf %8, %13 : vector<8x1152xf32>
    %15 = arith.addf %12, %14 : vector<8x1152xf32>
    %16 = vector.broadcast %3 : vector<1x1152xf32> to vector<8x1152xf32>
    %17 = arith.mulf %0, %16 : vector<8x1152xf32>
    %18 = arith.addf %15, %17 : vector<8x1152xf32>
    %19 = vector.broadcast %4 : vector<1x1152xf32> to vector<8x1152xf32>
    %20 = arith.mulf %9, %19 : vector<8x1152xf32>
    %21 = arith.addf %18, %20 : vector<8x1152xf32>
    %22 = vector.broadcast %5 : vector<1x1152xf32> to vector<8x1152xf32>
    %23 = arith.mulf %10, %22 : vector<8x1152xf32>
    %24 = arith.addf %21, %23 : vector<8x1152xf32>
    %25 = vector.broadcast %6 : vector<1x1152xf32> to vector<8x1152xf32>
    %26 = arith.addf %24, %25 : vector<8x1152xf32>
    %cst = arith.constant 0.000000e+00 : f32
    %27 = vector.broadcast %cst : f32 to vector<8x1152xf32>
    %28 = arith.maximumf %26, %27 : vector<8x1152xf32>
    %c0_8 = arith.constant 0 : index
    %c0_9 = arith.constant 0 : index
    %29 = vector.load %arg3[%c0_8, %c0_9] : memref<8x1152xf32, #tpu.memory_space<vmem>>, vector<8x1152xf32>
    tpu.vector_store %arg3[%c0_8, %c0_9], %28 {strides = array<i32>} : memref<8x1152xf32, #tpu.memory_space<vmem>>, vector<8x1152xf32>,
    return
  }
  func.func @transform_0(%arg0: i32) -> (i32, i32) {
    %c0_i32 = arith.constant 0 : i32
    %c0_i32_0 = arith.constant 0 : i32
    %c0_i32_1 = arith.constant 0 : i32
    return %c0_i32, %c0_i32_0 : i32, i32
  }
  func.func @transform_1(%arg0: i32) -> (i32, i32) {
    %c0_i32 = arith.constant 0 : i32
    %c0_i32_0 = arith.constant 0 : i32
    return %arg0, %c0_i32 : i32, i32
  }
  func.func @transform_2(%arg0: i32) -> (i32, i32) {
    %c0_i32 = arith.constant 0 : i32
    %c0_i32_0 = arith.constant 0 : i32
    return %arg0, %c0_i32 : i32, i32
  }
}

</mosaic_0001>

<llo_original>
// kernel: model_forward.1
$region0: #{model_forward.1}
  #allocation0 [shape = 'u32[]', space=smem, size = 0x4, offset = 0x4, fixed_abs, tag = 'smem constant byte address 0x4 - core index']
  #allocation1 [shape = 'u32[72,128]{1,0:T(1,128)}', space=vmem, size = 0x9000, scoped, tag = 'internal scratch']
  %s0 = inlined_call_operand.vmem [shape: f32[6,1152], index: 0, kind: input, shape index: {}]
  %s1 = inlined_call_operand.vmem [shape: f32[8,1152], index: 1, kind: input, shape index: {}]
  %s2 = inlined_call_operand.vmem [shape: f32[8,1152], index: 2, kind: output, shape index: {}]
  %s3 = sld [smem:[#allocation0]]
  $region18: #{model_forward.1} parent=0
    _
  %s5 = ssub.s32 1, %s3
  %s6 = scalar_select 0, %s5, %s3
  // Predicated region
  $region2: #{model_forward.1} parent=0 // pred_check
    _
  $region3: #{model_forward.1} parent=0 // pred_check_branch
    %8 = sbr.rel (0) target = $region5
  $region4: #{model_forward.1} parent=0 // pred_region
    _
  $region5: #{model_forward.1} parent=0 // pred_fallthru
    _
  // Predicated region
  $region6: #{model_forward.1} parent=0 // pred_check
    _
  $region7: #{model_forward.1} parent=0 // pred_check_branch
    %10 = sbr.rel (0) target = $region9
  $region8: #{model_forward.1} parent=0 // pred_region
    _
  $region9: #{model_forward.1} parent=0 // pred_fallthru
    _
  %v11 = vld [vmem:[%s1] sm:$0xff]
  %v12 = vld [vmem:[%s1 + $0x8] sm:$0xff]
  %v13 = vld [vmem:[%s1 + $0x10] sm:$0xff]
  %v14 = vld [vmem:[%s1 + $0x18] sm:$0xff]
  %v15 = vld [vmem:[%s1 + $0x20] sm:$0xff]
  %v16 = vld [vmem:[%s1 + $0x28] sm:$0xff]
  %v17 = vld [vmem:[%s1 + $0x30] sm:$0xff]
  %v18 = vld [vmem:[%s1 + $0x38] sm:$0xff]
  %v19 = vld [vmem:[%s1 + $0x40] sm:$0xff]
  %v20 = vld [vmem:[%s0] ss:$8 sm:$0xf]
  %v21 = vld [vmem:[%s0] ss:$8 sm:$0xf0]
  %v22 = vor.u32 %v20, %v21
  %s23 = scalar_lea.vmem %s0, 64
  %v24 = vld [vmem:[%s23] ss:$8 sm:$0x1]
  %s25 = scalar_lea.vmem %s0, 1
  %v26 = vld [vmem:[%s25] ss:$8 sm:$0xf]
  %v27 = vld [vmem:[%s25] ss:$8 sm:$0xf0]
  %v28 = vor.u32 %v26, %v27
  %s29 = scalar_lea.vmem %s0, 65
  %v30 = vld [vmem:[%s29] ss:$8 sm:$0x1]
  %s31 = scalar_lea.vmem %s0, 2
  %v32 = vld [vmem:[%s31] ss:$8 sm:$0xf]
  %v33 = vld [vmem:[%s31] ss:$8 sm:$0xf0]
  %v34 = vor.u32 %v32, %v33
  %s35 = scalar_lea.vmem %s0, 66
  %v36 = vld [vmem:[%s35] ss:$8 sm:$0x1]
  %s37 = scalar_lea.vmem %s0, 3
  %v38 = vld [vmem:[%s37] ss:$8 sm:$0xf]
  %v39 = vld [vmem:[%s37] ss:$8 sm:$0xf0]
  %v40 = vor.u32 %v38, %v39
  %s41 = scalar_lea.vmem %s0, 67
  %v42 = vld [vmem:[%s41] ss:$8 sm:$0x1]
  %s43 = scalar_lea.vmem %s0, 4
  %v44 = vld [vmem:[%s43] ss:$8 sm:$0xf]
  %v45 = vld [vmem:[%s43] ss:$8 sm:$0xf0]
  %v46 = vor.u32 %v44, %v45
  %s47 = scalar_lea.vmem %s0, 68
  %v48 = vld [vmem:[%s47] ss:$8 sm:$0x1]
  %s49 = scalar_lea.vmem %s0, 5
  %v50 = vld [vmem:[%s49] ss:$8 sm:$0xf]
  %v51 = vld [vmem:[%s49] ss:$8 sm:$0xf0]
  %v52 = vor.u32 %v50, %v51
  %s53 = scalar_lea.vmem %s0, 69
  %v54 = vld [vmem:[%s53] ss:$8 sm:$0x1]
  %55 = vrot.lane.b32.xlu0 %v11, 2
  %v56 = vpop.permute.xlu0 %55
  %57 = vrot.lane.b32.xlu0 %v12, 2
  %v58 = vpop.permute.xlu0 %57
  %59 = vrot.lane.b32.xlu0 %v13, 2
  %v60 = vpop.permute.xlu0 %59
  %61 = vrot.lane.b32.xlu0 %v14, 2
  %v62 = vpop.permute.xlu0 %61
  %63 = vrot.lane.b32.xlu0 %v15, 2
  %v64 = vpop.permute.xlu0 %63
  %65 = vrot.lane.b32.xlu0 %v16, 2
  %v66 = vpop.permute.xlu0 %65
  %67 = vrot.lane.b32.xlu0 %v17, 2
  %v68 = vpop.permute.xlu0 %67
  %69 = vrot.lane.b32.xlu0 %v18, 2
  %v70 = vpop.permute.xlu0 %69
  %71 = vrot.lane.b32.xlu0 %v19, 2
  %v72 = vpop.permute.xlu0 %71
  %v73 = vlaneseq
  %v74 = vand.u32 %v73, 127
  %vm75 = vcmp.lt.s32.totalorder %v74, 2
  %v76 = vsel %vm75, %v70, %v72
  %v77 = vsel %vm75, %v68, %v70
  %v78 = vsel %vm75, %v66, %v68
  %v79 = vsel %vm75, %v64, %v66
  %v80 = vsel %vm75, %v62, %v64
  %v81 = vsel %vm75, %v60, %v62
  %v82 = vsel %vm75, %v58, %v60
  %v83 = vsel %vm75, %v56, %v58
  %v84 = vsel %vm75, %v72, %v56
  %85 = vrot.lane.b32.xlu0 %v11, 1
  %v86 = vpop.permute.xlu0 %85
  %87 = vrot.lane.b32.xlu0 %v12, 1
  %v88 = vpop.permute.xlu0 %87
  %89 = vrot.lane.b32.xlu0 %v13, 1
  %v90 = vpop.permute.xlu0 %89
  %91 = vrot.lane.b32.xlu0 %v14, 1
  %v92 = vpop.permute.xlu0 %91
  %93 = vrot.lane.b32.xlu0 %v15, 1
  %v94 = vpop.permute.xlu0 %93
  %95 = vrot.lane.b32.xlu0 %v16, 1
  %v96 = vpop.permute.xlu0 %95
  %97 = vrot.lane.b32.xlu0 %v17, 1
  %v98 = vpop.permute.xlu0 %97
  %99 = vrot.lane.b32.xlu0 %v18, 1
  %v100 = vpop.permute.xlu0 %99
  %101 = vrot.lane.b32.xlu0 %v19, 1
  %v102 = vpop.permute.xlu0 %101
  %vm103 = vcmp.lt.s32.totalorder %v74, 1
  %v104 = vsel %vm103, %v100, %v102
  %v105 = vsel %vm103, %v98, %v100
  %v106 = vsel %vm103, %v96, %v98
  %v107 = vsel %vm103, %v94, %v96
  %v108 = vsel %vm103, %v92, %v94
  %v109 = vsel %vm103, %v90, %v92
  %v110 = vsel %vm103, %v88, %v90
  %v111 = vsel %vm103, %v86, %v88
  %v112 = vsel %vm103, %v102, %v86
  %113 = vrot.lane.b32.xlu0 %v11, 127
  %v114 = vpop.permute.xlu0 %113
  %115 = vrot.lane.b32.xlu0 %v12, 127
  %v116 = vpop.permute.xlu0 %115
  %117 = vrot.lane.b32.xlu0 %v13, 127
  %v118 = vpop.permute.xlu0 %117
  %119 = vrot.lane.b32.xlu0 %v14, 127
  %v120 = vpop.permute.xlu0 %119
  %121 = vrot.lane.b32.xlu0 %v15, 127
  %v122 = vpop.permute.xlu0 %121
  %123 = vrot.lane.b32.xlu0 %v16, 127
  %v124 = vpop.permute.xlu0 %123
  %125 = vrot.lane.b32.xlu0 %v17, 127
  %v126 = vpop.permute.xlu0 %125
  %127 = vrot.lane.b32.xlu0 %v18, 127
  %v128 = vpop.permute.xlu0 %127
  %129 = vrot.lane.b32.xlu0 %v19, 127
  %v130 = vpop.permute.xlu0 %129
  %vm131 = vcmp.lt.s32.totalorder %v74, 127
  %v132 = vsel %vm131, %v128, %v130
  %v133 = vsel %vm131, %v126, %v128
  %v134 = vsel %vm131, %v124, %v126
  %v135 = vsel %vm131, %v122, %v124
  %v136 = vsel %vm131, %v120, %v122
  %v137 = vsel %vm131, %v118, %v120
  %v138 = vsel %vm131, %v116, %v118
  %v139 = vsel %vm131, %v114, %v116
  %v140 = vsel %vm131, %v130, %v114
  %141 = vrot.lane.b32.xlu0 %v11, 126
  %v142 = vpop.permute.xlu0 %141
  %143 = vrot.lane.b32.xlu0 %v12, 126
  %v144 = vpop.permute.xlu0 %143
  %145 = vrot.lane.b32.xlu0 %v13, 126
  %v146 = vpop.permute.xlu0 %145
  %147 = vrot.lane.b32.xlu0 %v14, 126
  %v148 = vpop.permute.xlu0 %147
  %149 = vrot.lane.b32.xlu0 %v15, 126
  %v150 = vpop.permute.xlu0 %149
  %151 = vrot.lane.b32.xlu0 %v16, 126
  %v152 = vpop.permute.xlu0 %151
  %153 = vrot.lane.b32.xlu0 %v17, 126
  %v154 = vpop.permute.xlu0 %153
  %155 = vrot.lane.b32.xlu0 %v18, 126
  %v156 = vpop.permute.xlu0 %155
  %157 = vrot.lane.b32.xlu0 %v19, 126
  %v158 = vpop.permute.xlu0 %157
  %vm159 = vcmp.lt.s32.totalorder %v74, 126
  %v160 = vsel %vm159, %v156, %v158
  %v161 = vsel %vm159, %v154, %v156
  %v162 = vsel %vm159, %v152, %v154
  %v163 = vsel %vm159, %v150, %v152
  %v164 = vsel %vm159, %v148, %v150
  %v165 = vsel %vm159, %v146, %v148
  %v166 = vsel %vm159, %v144, %v146
  %v167 = vsel %vm159, %v142, %v144
  %v168 = vsel %vm159, %v158, %v142
  %v171 = vperm.slane %v22, 0
  %v172 = vperm.slane %v22, 1
  %v173 = vperm.slane %v22, 2
  %v174 = vperm.slane %v22, 3
  %v175 = vperm.slane %v22, 4
  %v176 = vperm.slane %v22, 5
  %v177 = vperm.slane %v22, 6
  %v178 = vperm.slane %v22, 7
  %v179 = vperm.slane %v24, 0
  %v189 = vmul.f32 %v84, %v171
  %v190 = vmul.f32 %v83, %v172
  %v191 = vmul.f32 %v82, %v173
  %v192 = vmul.f32 %v81, %v174
  %v193 = vmul.f32 %v80, %v175
  %v194 = vmul.f32 %v79, %v176
  %v195 = vmul.f32 %v78, %v177
  %v196 = vmul.f32 %v77, %v178
  %v197 = vmul.f32 %v76, %v179
  %v200 = vperm.slane %v28, 0
  %v201 = vperm.slane %v28, 1
  %v202 = vperm.slane %v28, 2
  %v203 = vperm.slane %v28, 3
  %v204 = vperm.slane %v28, 4
  %v205 = vperm.slane %v28, 5
  %v206 = vperm.slane %v28, 6
  %v207 = vperm.slane %v28, 7
  %v208 = vperm.slane %v30, 0
  %v218 = vmul.f32 %v112, %v200
  %v219 = vmul.f32 %v111, %v201
  %v220 = vmul.f32 %v110, %v202
  %v221 = vmul.f32 %v109, %v203
  %v222 = vmul.f32 %v108, %v204
  %v223 = vmul.f32 %v107, %v205
  %v224 = vmul.f32 %v106, %v206
  %v225 = vmul.f32 %v105, %v207
  %v226 = vmul.f32 %v104, %v208
  %v227 = vadd.f32 %v189, %v218
  %v228 = vadd.f32 %v190, %v219
  %v229 = vadd.f32 %v191, %v220
  %v230 = vadd.f32 %v192, %v221
  %v231 = vadd.f32 %v193, %v222
  %v232 = vadd.f32 %v194, %v223
  %v233 = vadd.f32 %v195, %v224
  %v234 = vadd.f32 %v196, %v225
  %v235 = vadd.f32 %v197, %v226
  %v238 = vperm.slane %v34, 0
  %v239 = vperm.slane %v34, 1
  %v240 = vperm.slane %v34, 2
  %v241 = vperm.slane %v34, 3
  %v242 = vperm.slane %v34, 4
  %v243 = vperm.slane %v34, 5
  %v244 = vperm.slane %v34, 6
  %v245 = vperm.slane %v34, 7
  %v246 = vperm.slane %v36, 0
  %v256 = vmul.f32 %v11, %v238
  %v257 = vmul.f32 %v12, %v239
  %v258 = vmul.f32 %v13, %v240
  %v259 = vmul.f32 %v14, %v241
  %v260 = vmul.f32 %v15, %v242
  %v261 = vmul.f32 %v16, %v243
  %v262 = vmul.f32 %v17, %v244
  %v263 = vmul.f32 %v18, %v245
  %v264 = vmul.f32 %v19, %v246
  %v265 = vadd.f32 %v227, %v256
  %v266 = vadd.f32 %v228, %v257
  %v267 = vadd.f32 %v229, %v258
  %v268 = vadd.f32 %v230, %v259
  %v269 = vadd.f32 %v231, %v260
  %v270 = vadd.f32 %v232, %v261
  %v271 = vadd.f32 %v233, %v262
  %v272 = vadd.f32 %v234, %v263
  %v273 = vadd.f32 %v235, %v264
  %v276 = vperm.slane %v40, 0
  %v277 = vperm.slane %v40, 1
  %v278 = vperm.slane %v40, 2
  %v279 = vperm.slane %v40, 3
  %v280 = vperm.slane %v40, 4
  %v281 = vperm.slane %v40, 5
  %v282 = vperm.slane %v40, 6
  %v283 = vperm.slane %v40, 7
  %v284 = vperm.slane %v42, 0
  %v294 = vmul.f32 %v139, %v276
  %v295 = vmul.f32 %v138, %v277
  %v296 = vmul.f32 %v137, %v278
  %v297 = vmul.f32 %v136, %v279
  %v298 = vmul.f32 %v135, %v280
  %v299 = vmul.f32 %v134, %v281
  %v300 = vmul.f32 %v133, %v282
  %v301 = vmul.f32 %v132, %v283
  %v302 = vmul.f32 %v140, %v284
  %v303 = vadd.f32 %v265, %v294
  %v304 = vadd.f32 %v266, %v295
  %v305 = vadd.f32 %v267, %v296
  %v306 = vadd.f32 %v268, %v297
  %v307 = vadd.f32 %v269, %v298
  %v308 = vadd.f32 %v270, %v299
  %v309 = vadd.f32 %v271, %v300
  %v310 = vadd.f32 %v272, %v301
  %v311 = vadd.f32 %v273, %v302
  %v314 = vperm.slane %v46, 0
  %v315 = vperm.slane %v46, 1
  %v316 = vperm.slane %v46, 2
  %v317 = vperm.slane %v46, 3
  %v318 = vperm.slane %v46, 4
  %v319 = vperm.slane %v46, 5
  %v320 = vperm.slane %v46, 6
  %v321 = vperm.slane %v46, 7
  %v322 = vperm.slane %v48, 0
  %v332 = vmul.f32 %v167, %v314
  %v333 = vmul.f32 %v166, %v315
  %v334 = vmul.f32 %v165, %v316
  %v335 = vmul.f32 %v164, %v317
  %v336 = vmul.f32 %v163, %v318
  %v337 = vmul.f32 %v162, %v319
  %v338 = vmul.f32 %v161, %v320
  %v339 = vmul.f32 %v160, %v321
  %v340 = vmul.f32 %v168, %v322
  %v341 = vadd.f32 %v303, %v332
  %v342 = vadd.f32 %v304, %v333
  %v343 = vadd.f32 %v305, %v334
  %v344 = vadd.f32 %v306, %v335
  %v345 = vadd.f32 %v307, %v336
  %v346 = vadd.f32 %v308, %v337
  %v347 = vadd.f32 %v309, %v338
  %v348 = vadd.f32 %v310, %v339
  %v349 = vadd.f32 %v311, %v340
  %v352 = vperm.slane %v52, 0
  %v353 = vperm.slane %v52, 1
  %v354 = vperm.slane %v52, 2
  %v355 = vperm.slane %v52, 3
  %v356 = vperm.slane %v52, 4
  %v357 = vperm.slane %v52, 5
  %v358 = vperm.slane %v52, 6
  %v359 = vperm.slane %v52, 7
  %v360 = vperm.slane %v54, 0
  %v370 = vadd.f32 %v341, %v352
  %v371 = vadd.f32 %v342, %v353
  %v372 = vadd.f32 %v343, %v354
  %v373 = vadd.f32 %v344, %v355
  %v374 = vadd.f32 %v345, %v356
  %v375 = vadd.f32 %v346, %v357
  %v376 = vadd.f32 %v347, %v358
  %v377 = vadd.f32 %v348, %v359
  %v378 = vadd.f32 %v349, %v360
  %v379 = vmax.f32 %v370, 0.0
  %v380 = vmax.f32 %v371, 0.0
  %v381 = vmax.f32 %v372, 0.0
  %v382 = vmax.f32 %v373, 0.0
  %v383 = vmax.f32 %v374, 0.0
  %v384 = vmax.f32 %v375, 0.0
  %v385 = vmax.f32 %v376, 0.0
  %v386 = vmax.f32 %v377, 0.0
  %v387 = vmax.f32 %v378, 0.0
  %388 = vst [vmem:[%s2] sm:$0xff] %v379
  %389 = vst [vmem:[%s2 + $0x8] sm:$0xff] %v380
  %390 = vst [vmem:[%s2 + $0x10] sm:$0xff] %v381
  %391 = vst [vmem:[%s2 + $0x18] sm:$0xff] %v382
  %392 = vst [vmem:[%s2 + $0x20] sm:$0xff] %v383
  %393 = vst [vmem:[%s2 + $0x28] sm:$0xff] %v384
  %394 = vst [vmem:[%s2 + $0x30] sm:$0xff] %v385
  %395 = vst [vmem:[%s2 + $0x38] sm:$0xff] %v386
  %396 = vst [vmem:[%s2 + $0x40] sm:$0xff] %v387
  // Predicated region
  $region10: #{model_forward.1} parent=0 // pred_check
    _
  $region11: #{model_forward.1} parent=0 // pred_check_branch
    %398 = sbr.rel (0) target = $region13
  $region12: #{model_forward.1} parent=0 // pred_region
    _
  $region13: #{model_forward.1} parent=0 // pred_fallthru
    _
  // Predicated region
  $region14: #{model_forward.1} parent=0 // pred_check
    _
  $region15: #{model_forward.1} parent=0 // pred_check_branch
    %400 = sbr.rel (0) target = $region17
  $region16: #{model_forward.1} parent=0 // pred_region
    _
  $region17: #{model_forward.1} parent=0 // pred_fallthru
    _

</llo_original>
